<compile_context>
chip_gen: v7x
topology: tpu7x:2x2x1
jax: 0.10.0
libtpu: 0.0.40
codegen_flags: <defaults>
</compile_context>

<pallas_src>
import math
from functools import partial

import jax
import jax.numpy as jnp
from jax.experimental import pallas as pl
from jax.experimental.pallas import tpu as pltpu

_INV_SQRT2 = 1.0 / math.sqrt(2.0)


def _gelu(h, exact):
    if exact:
        # Exact erf GELU (torch.nn.GELU default) - runs on the VALU.
        return 0.5 * h * (1.0 + jax.lax.erf(h * _INV_SQRT2))
    # tanh approximation -> transcendental goes to the (otherwise idle) EUP slot.
    return jax.nn.gelu(h, approximate=True)


def _mlp_resident_kernel(x_ref, w1_ref, b1_ref, w2_ref, b2_ref, o_ref, *, exact_gelu):
    # Whole W1/W2/b1/b2 are VMEM-resident (grid-constant blocks); single row grid.
    h = jnp.dot(x_ref[...], w1_ref[...], preferred_element_type=jnp.float32)
    h = _gelu(h + b1_ref[...], exact_gelu)
    out = jnp.dot(h.astype(w2_ref.dtype), w2_ref[...],
                  preferred_element_type=jnp.float32)
    o_ref[...] = (out + b2_ref[...]).astype(o_ref.dtype)


def _mlp_streamed_kernel(x_ref, w1_ref, b1_ref, w2_ref, b2_ref, o_ref, acc_ref,
                         *, exact_gelu):
    k = pl.program_id(1)          # hidden-dim (reduction) axis, innermost

    @pl.when(k == 0)
    def _init():
        # Fold the fc2 bias into the accumulator init (saves the finalize add).
        acc_ref[...] = jnp.zeros_like(acc_ref) + b2_ref[...]

    # fc1 chunk: (tm, D_in) @ (D_in, th) -> f32; bias + GELU in f32.
    h = jnp.dot(x_ref[...], w1_ref[...], preferred_element_type=jnp.float32)
    h = _gelu(h + b1_ref[...], exact_gelu)

    # fc2 chunk: accumulate (tm, th) @ (th, D_out) into the f32 scratch accumulator.
    acc_ref[...] += jnp.dot(h.astype(w2_ref.dtype), w2_ref[...],
                            preferred_element_type=jnp.float32)

    @pl.when(k == pl.num_programs(1) - 1)
    def _finalize():
        o_ref[...] = acc_ref[...].astype(o_ref.dtype)


def _round_up(a, b):
    return (a + b - 1) // b * b


def _pick_th(H, tile_h):
    """Largest multiple-of-128 divisor of H that is <= tile_h (falls back to H)."""
    if H % 128 != 0:
        return H
    best = 128
    cap = min(max(tile_h, 128), H)
    for cand in range(128, cap + 1, 128):
        if H % cand == 0:
            best = cand
    return best


def _vmem_capacity_bytes():
    try:
        info = pltpu.get_tpu_info()
        cap = int(getattr(info, "vmem_capacity_bytes", 0))
        if cap > 0:
            return cap
    except Exception:
        pass
    return 64 * 1024 * 1024   # conservative default (v7x per-TC VMEM)


def mlp_pallas(x, w1, b1, w2, b2, *, tile_m=None, tile_h=512,
               compute_dtype=jnp.bfloat16, exact_gelu=False, force_path="auto"):
    """Fused MLP: GELU(x @ W1 + b1) @ W2 + b2   (dropout p=0 -> identity).

    x: (..., D_in), w1: (D_in, H), b1: (H,), w2: (H, D_out), b2: (D_out,).
    """
    orig_dtype = x.dtype
    *lead, D_in = x.shape
    H = int(w1.shape[1])
    D_out = int(w2.shape[1])
    M = 1
    for d in lead:
        M *= int(d)

    per_elem = jnp.dtype(compute_dtype).itemsize
    out_elem = jnp.dtype(orig_dtype).itemsize

    vmem_cap = _vmem_capacity_bytes()
    budget = int(vmem_cap * 0.75)

    # Row tile: MXU-friendly; ragged last block is handled by Pallas (no host pad).
    # NOTE: for megacore (v7x) keep M/tm >= 2 when M is large so both TCs get tiles;
    # with tile_m=512 that holds for any realistic ViT batch*seq.
    tm_req = 512 if tile_m is None else tile_m
    tm = max(8, min(_round_up(tm_req, 8), _round_up(M, 8)))

    weight_bytes = (D_in * H + H * D_out) * per_elem + (H + D_out) * 4

    def resident_est(t):
        return (weight_bytes                          # W1/W2/b1/b2 single-buffered
                + 2 * t * D_in * per_elem             # x, double-buffered
                + 2 * t * D_out * out_elem            # out, double-buffered
                + t * H * (4 + per_elem)              # f32 h + bf16-cast temporary
                + t * D_out * 4)                      # f32 pre-cast output

    def streamed_est(t, th):
        return (2 * t * D_in * per_elem
                + 2 * D_in * th * per_elem            # W1 blocks, double-buffered
                + 2 * th * D_out * per_elem           # W2 blocks, double-buffered
                + 2 * th * 4 + D_out * 4              # b1 blocks + b2
                + 2 * t * D_out * out_elem
                + t * D_out * 4                       # f32 accumulator scratch
                + t * th * (4 + per_elem))            # f32 h + bf16-cast temporary

    def shrink(t, fits):
        while t > 8 and not fits(t):
            t = max(8, _round_up(t // 2, 8))
        return t

    use_resident = (force_path == "resident")
    if force_path == "auto":
        t = shrink(tm, lambda t: resident_est(t) <= budget)
        if weight_bytes <= budget and resident_est(t) <= budget:
            use_resident = True
            tm = t

    x2 = x.reshape(M, D_in).astype(compute_dtype)
    w1c = w1.astype(compute_dtype)
    w2c = w2.astype(compute_dtype)
    b1_2 = b1.reshape(1, H).astype(jnp.float32)
    b2_2 = b2.reshape(1, D_out).astype(jnp.float32)
    # TODO(synk): on v6e/v7x the bias+GELU math could run in bf16 (2x VALU packing);
    # kept in f32 here to stay close to torch.nn.GELU numerics and for v5e.

    if use_resident:
        est = resident_est(tm)
        vmem_limit = int(min(vmem_cap * 0.95, max(est + (8 << 20), 32 << 20)))
        const = dict(pipeline_mode=pl.Buffered(1))    # grid-constant: DMA'd once
        out2 = pl.pallas_call(
            partial(_mlp_resident_kernel, exact_gelu=exact_gelu),
            out_shape=jax.ShapeDtypeStruct((M, D_out), orig_dtype),
            grid_spec=pltpu.PrefetchScalarGridSpec(
                num_scalar_prefetch=0,
                grid=(pl.cdiv(M, tm),),
                in_specs=[
                    pl.BlockSpec((tm, D_in), lambda i: (i, 0)),        # x rows
                    pl.BlockSpec((D_in, H), lambda i: (0, 0), **const),  # W1 resident
                    pl.BlockSpec((1, H), lambda i: (0, 0), **const),     # b1 resident
                    pl.BlockSpec((H, D_out), lambda i: (0, 0), **const), # W2 resident
                    pl.BlockSpec((1, D_out), lambda i: (0, 0), **const), # b2 resident
                ],
                out_specs=pl.BlockSpec((tm, D_out), lambda i: (i, 0)),
            ),
            compiler_params=pltpu.CompilerParams(
                dimension_semantics=("parallel",),
                vmem_limit_bytes=vmem_limit),
        )(x2, w1c, b1_2, w2c, b2_2)
    else:
        th = _pick_th(H, tile_h)
        tm = shrink(tm, lambda t: streamed_est(t, th) <= budget)
        est = streamed_est(tm, th)
        vmem_limit = int(min(vmem_cap * 0.95, max(est + (8 << 20), 32 << 20)))
        out2 = pl.pallas_call(
            partial(_mlp_streamed_kernel, exact_gelu=exact_gelu),
            out_shape=jax.ShapeDtypeStruct((M, D_out), orig_dtype),
            grid_spec=pltpu.PrefetchScalarGridSpec(
                num_scalar_prefetch=0,
                grid=(pl.cdiv(M, tm), H // th),
                in_specs=[
                    pl.BlockSpec((tm, D_in), lambda i, k: (i, 0)),     # x rows
                    pl.BlockSpec((D_in, th), lambda i, k: (0, k)),     # W1 hidden chunk
                    pl.BlockSpec((1, th), lambda i, k: (0, k)),        # b1 hidden chunk
                    pl.BlockSpec((th, D_out), lambda i, k: (k, 0)),    # W2 hidden chunk
                    pl.BlockSpec((1, D_out), lambda i, k: (0, 0),      # b2 grid-constant
                                 pipeline_mode=pl.Buffered(1)),
                ],
                out_specs=pl.BlockSpec((tm, D_out), lambda i, k: (i, 0)),
                scratch_shapes=[pltpu.VMEM((tm, D_out), jnp.float32)],
            ),
            compiler_params=pltpu.CompilerParams(
                dimension_semantics=("parallel", "arbitrary"),
                vmem_limit_bytes=vmem_limit),
        )(x2, w1c, b1_2, w2c, b2_2)

    return out2.reshape(*lead, D_out)


def _init_linear(key, fan_in, fan_out, dtype=jnp.float32):
    """Deterministic init mimicking torch.nn.Linear defaults."""
    kw, kb = jax.random.split(key)
    bound_w = math.sqrt(1.0 / fan_in) * math.sqrt(3.0)   # kaiming_uniform(a=sqrt(5))
    w = jax.random.uniform(kw, (fan_in, fan_out), dtype, -bound_w, bound_w)
    bound_b = 1.0 / math.sqrt(fan_in)
    b = jax.random.uniform(kb, (fan_out,), dtype, -bound_b, bound_b)
    return w, b


def _ref_mlp(xf, w1, b1, w2, b2, approx):
    """Pure-JAX reference matching the kernel's bf16-operand / f32-accumulate numerics."""
    xb = xf.astype(jnp.bfloat16).astype(jnp.float32)
    w1b = w1.astype(jnp.bfloat16).astype(jnp.float32)
    w2b = w2.astype(jnp.bfloat16).astype(jnp.float32)
    h = jax.nn.gelu(xb @ w1b + b1, approximate=approx)
    return h.astype(jnp.bfloat16).astype(jnp.float32) @ w2b + b2


if __name__ == "__main__":
    key = jax.random.PRNGKey(0)
    k_x, k_fc1, k_fc2, k_x2, k_fc1b, k_fc2b = jax.random.split(key, 6)

    # ---- Test 1: default (weight-resident) path, small ViT-like shapes ----
    B, N, D_in, H = 2, 8, 32, 64
    D_out = D_in
    x = jax.random.normal(k_x, (B, N, D_in), jnp.float32)
    w1, b1 = _init_linear(k_fc1, D_in, H)
    w2, b2 = _init_linear(k_fc2, H, D_out)

    out = jax.block_until_ready(mlp_pallas(x, w1, b1, w2, b2))
    assert out.shape == (B, N, D_out)
    assert jnp.allclose(out, _ref_mlp(x, w1, b1, w2, b2, True), atol=2e-2, rtol=2e-2)
    # Coarse sanity check against the pure-f32 exact-erf (torch) semantics.
    ref_f32 = jax.nn.gelu(x @ w1 + b1, approximate=False) @ w2 + b2
    assert jnp.allclose(out, ref_f32, atol=1e-1, rtol=1e-1)

    # ---- Test 2: streamed (hidden-tiled) path, exact erf GELU, ragged row count ----
    H2 = 256
    x_r = jax.random.normal(k_x2, (3, 7, D_in), jnp.float32)   # M=21 (ragged tile)
    w1r, b1r = _init_linear(k_fc1b, D_in, H2)
    w2r, b2r = _init_linear(k_fc2b, H2, D_out)
    out_r = jax.block_until_ready(
        mlp_pallas(x_r, w1r, b1r, w2r, b2r, tile_h=128,
                   force_path="streamed", exact_gelu=True))
    assert out_r.shape == (3, 7, D_out)
    assert jnp.allclose(out_r, _ref_mlp(x_r, w1r, b1r, w2r, b2r, False),
                        atol=2e-2, rtol=2e-2)

    print("KERNEL_OK")
</pallas_src>

<mosaic_0001>
module attributes {stable_mosaic.version = 11 : i64} {
  func.func @_mlp_resident_kernel(%arg0: i32, %arg1: memref<16x32xbf16, #tpu.memory_space<vmem>>, %arg2: memref<32x64xbf16, #tpu.memory_space<vmem>>, %arg3: memref<1x64xf32, #tpu.memory_space<vmem>>, %arg4: memref<64x32xbf16, #tpu.memory_space<vmem>>, %arg5: memref<1x32xf32, #tpu.memory_space<vmem>>, %arg6: memref<16x32xf32, #tpu.memory_space<vmem>>) attributes {dimension_semantics = [#tpu.dimension_semantics<parallel>], iteration_bounds = array<i64: 1>, scalar_prefetch = 0 : i64, scratch_operands = 0 : i64, tpu.core_type = #tpu.core_type<tc>, window_params = [{transform_indices = @transform_0, window_bounds = array<i64: 16, 32>}, {pipeline_mode = #tpu.pipeline_mode<synchronous>, transform_indices = @transform_1, window_bounds = array<i64: 32, 64>}, {pipeline_mode = #tpu.pipeline_mode<synchronous>, transform_indices = @transform_2, window_bounds = array<i64: 1, 64>}, {pipeline_mode = #tpu.pipeline_mode<synchronous>, transform_indices = @transform_3, window_bounds = array<i64: 64, 32>}, {pipeline_mode = #tpu.pipeline_mode<synchronous>, transform_indices = @transform_4, window_bounds = array<i64: 1, 32>}, {transform_indices = @transform_5, window_bounds = array<i64: 16, 32>}]} {
    %c0 = arith.constant 0 : index
    %c0_0 = arith.constant 0 : index
    %0 = vector.load %arg1[%c0, %c0_0] : memref<16x32xbf16, #tpu.memory_space<vmem>>, vector<16x32xbf16>
    %c0_1 = arith.constant 0 : index
    %c0_2 = arith.constant 0 : index
    %1 = vector.load %arg2[%c0_1, %c0_2] : memref<32x64xbf16, #tpu.memory_space<vmem>>, vector<32x64xbf16>
    %cst = arith.constant dense<0.000000e+00> : vector<16x64xf32>
    %2 = tpu.matmul %0, %1, %cst {dimension_numbers = #tpu.dot_dimension_numbers<[1], [0], [0], [1], [0, 0, 1, 1], [], []>} : vector<16x32xbf16>, vector<32x64xbf16>, vector<16x64xf32> -> vector<16x64xf32>
    %c0_3 = arith.constant 0 : index
    %c0_4 = arith.constant 0 : index
    %3 = vector.load %arg3[%c0_3, %c0_4] : memref<1x64xf32, #tpu.memory_space<vmem>>, vector<1x64xf32>
    %4 = vector.broadcast %3 : vector<1x64xf32> to vector<16x64xf32>
    %5 = arith.addf %2, %4 : vector<16x64xf32>
    %6 = arith.mulf %5, %5 : vector<16x64xf32>
    %7 = arith.mulf %5, %6 : vector<16x64xf32>
    %cst_5 = arith.constant 4.471500e-02 : f32
    %8 = vector.broadcast %cst_5 : f32 to vector<16x64xf32>
    %9 = arith.mulf %8, %7 : vector<16x64xf32>
    %10 = arith.addf %5, %9 : vector<16x64xf32>
    %cst_6 = arith.constant 0.797884583 : f32
    %11 = vector.broadcast %cst_6 : f32 to vector<16x64xf32>
    %12 = arith.mulf %11, %10 : vector<16x64xf32>
    %13 = math.tanh %12 : vector<16x64xf32>
    %cst_7 = arith.constant 1.000000e+00 : f32
    %14 = vector.broadcast %cst_7 : f32 to vector<16x64xf32>
    %15 = arith.addf %14, %13 : vector<16x64xf32>
    %cst_8 = arith.constant 5.000000e-01 : f32
    %16 = vector.broadcast %cst_8 : f32 to vector<16x64xf32>
    %17 = arith.mulf %16, %15 : vector<16x64xf32>
    %18 = arith.mulf %5, %17 : vector<16x64xf32>
    %19 = arith.truncf %18 : vector<16x64xf32> to vector<16x64xbf16>
    %c0_9 = arith.constant 0 : index
    %c0_10 = arith.constant 0 : index
    %20 = vector.load %arg4[%c0_9, %c0_10] : memref<64x32xbf16, #tpu.memory_space<vmem>>, vector<64x32xbf16>
    %cst_11 = arith.constant dense<0.000000e+00> : vector<16x32xf32>
    %21 = tpu.matmul %19, %20, %cst_11 {dimension_numbers = #tpu.dot_dimension_numbers<[1], [0], [0], [1], [0, 0, 1, 1], [], []>} : vector<16x64xbf16>, vector<64x32xbf16>, vector<16x32xf32> -> vector<16x32xf32>
    %c0_12 = arith.constant 0 : index
    %c0_13 = arith.constant 0 : index
    %22 = vector.load %arg5[%c0_12, %c0_13] : memref<1x32xf32, #tpu.memory_space<vmem>>, vector<1x32xf32>
    %23 = vector.broadcast %22 : vector<1x32xf32> to vector<16x32xf32>
    %24 = arith.addf %21, %23 : vector<16x32xf32>
    %c0_14 = arith.constant 0 : index
    %c0_15 = arith.constant 0 : index
    %25 = vector.load %arg6[%c0_14, %c0_15] : memref<16x32xf32, #tpu.memory_space<vmem>>, vector<16x32xf32>
    tpu.vector_store %arg6[%c0_14, %c0_15], %24 {strides = array<i32>} : memref<16x32xf32, #tpu.memory_space<vmem>>, vector<16x32xf32>,
    return
  }
  func.func @transform_0(%arg0: i32) -> (i32, i32) {
    %c0_i32 = arith.constant 0 : i32
    %c0_i32_0 = arith.constant 0 : i32
    return %arg0, %c0_i32 : i32, i32
  }
  func.func @transform_1(%arg0: i32) -> (i32, i32) {
    %c0_i32 = arith.constant 0 : i32
    %c0_i32_0 = arith.constant 0 : i32
    %c0_i32_1 = arith.constant 0 : i32
    return %c0_i32, %c0_i32_0 : i32, i32
  }
  func.func @transform_2(%arg0: i32) -> (i32, i32) {
    %c0_i32 = arith.constant 0 : i32
    %c0_i32_0 = arith.constant 0 : i32
    %c0_i32_1 = arith.constant 0 : i32
    return %c0_i32, %c0_i32_0 : i32, i32
  }
  func.func @transform_3(%arg0: i32) -> (i32, i32) {
    %c0_i32 = arith.constant 0 : i32
    %c0_i32_0 = arith.constant 0 : i32
    %c0_i32_1 = arith.constant 0 : i32
    return %c0_i32, %c0_i32_0 : i32, i32
  }
  func.func @transform_4(%arg0: i32) -> (i32, i32) {
    %c0_i32 = arith.constant 0 : i32
    %c0_i32_0 = arith.constant 0 : i32
    %c0_i32_1 = arith.constant 0 : i32
    return %c0_i32, %c0_i32_0 : i32, i32
  }
  func.func @transform_5(%arg0: i32) -> (i32, i32) {
    %c0_i32 = arith.constant 0 : i32
    %c0_i32_0 = arith.constant 0 : i32
    return %arg0, %c0_i32 : i32, i32
  }
}

</mosaic_0001>

<llo_original>
// kernel: tpu_custom_call.1
$region0: #{tpu_custom_call.1}
  #allocation0 [shape = 'u32[]', space=smem, size = 0x4, offset = 0x4, fixed_abs, tag = 'smem constant byte address 0x4 - core index']
  #allocation1 [shape = 'u32[144,128]{1,0:T(1,128)}', space=vmem, size = 0x12000, scoped, tag = 'internal scratch']
  %s0 = inlined_call_operand.vmem [shape: bf16[16,32], index: 0, kind: input, shape index: {}]
  %s1 = inlined_call_operand.vmem [shape: bf16[32,64], index: 1, kind: input, shape index: {}]
  %s2 = inlined_call_operand.vmem [shape: f32[1,64], index: 2, kind: input, shape index: {}]
  %s3 = inlined_call_operand.vmem [shape: bf16[64,32], index: 3, kind: input, shape index: {}]
  %s4 = inlined_call_operand.vmem [shape: f32[1,32], index: 4, kind: input, shape index: {}]
  %s5 = inlined_call_operand.hbm [shape: f32[16,32], index: 5, kind: output, shape index: {}]
  %s6 = sld [smem:[#allocation0]]
  $region30: #{tpu_custom_call.1} parent=0
    _
  %s8 = ssub.s32 1, %s6
  %s9 = scalar_select 0, %s8, %s6
  $region1: #{tpu_custom_call.1} parent=0
    #allocation2 [shape = 'u8[8192]{0}', space=vmem, size = 0x2000, scoped, tag = 'output window, operand 0, single buffered']
    #allocation3 [shape = 's32[1]{0}', space=sflag, size = 0x4, scoped, tag = 'scoped memory for tpu_custom_call.1']
    %10 = vsyncpa [#allocation3], 0
    // Predicated region
    $region2: #{tpu_custom_call.1} parent=1 // pred_check
      _
    $region3: #{tpu_custom_call.1} parent=1 // pred_check_branch
      %12 = sbr.rel (0) target = $region5
    $region4: #{tpu_custom_call.1} parent=1 // pred_region
      _
    $region5: #{tpu_custom_call.1} parent=1 // pred_fallthru
      _
    // Predicated region
    $region6: #{tpu_custom_call.1} parent=1 // pred_check
      _
    $region7: #{tpu_custom_call.1} parent=1 // pred_check_branch
      %14 = sbr.rel (0) target = $region9
    $region8: #{tpu_custom_call.1} parent=1 // pred_region
      _
    $region9: #{tpu_custom_call.1} parent=1 // pred_fallthru
      _
    // Predicated region
    $region10: #{tpu_custom_call.1} parent=1 // pred_check
      _
    $region11: #{tpu_custom_call.1} parent=1 // pred_check_branch
      %16 = sbr.rel (0) target = $region13
    $region12: #{tpu_custom_call.1} parent=1 // pred_region
      _
    $region13: #{tpu_custom_call.1} parent=1 // pred_fallthru
      _
    // Predicated region
    $region14: #{tpu_custom_call.1} parent=1 // pred_check
      _
    $region15: #{tpu_custom_call.1} parent=1 // pred_check_branch
      %18 = sbr.rel (0) target = $region17
    $region16: #{tpu_custom_call.1} parent=1 // pred_region
      _
    $region17: #{tpu_custom_call.1} parent=1 // pred_fallthru
      _
    // Predicated region
    $region18: #{tpu_custom_call.1} parent=1 // pred_check
      _
    $region19: #{tpu_custom_call.1} parent=1 // pred_check_branch
      %20 = sbr.rel (0) target = $region21
    $region20: #{tpu_custom_call.1} parent=1 // pred_region
      _
    $region21: #{tpu_custom_call.1} parent=1 // pred_fallthru
      _
    %v22 = vld [vmem:[%s0] sm:$0xf]
    %v23 = vld [vmem:[%s0 + $0x4] sm:$0xf]
    %v24 = vld [vmem:[%s1] sm:$0xf]
    %v25 = vld [vmem:[%s1 + $0x4] sm:$0xf]
    %v26 = vld [vmem:[%s1 + $0x8] sm:$0xf]
    %v27 = vld [vmem:[%s1 + $0xc] sm:$0xf]
    %v28 = vld [vmem:[%s2] sm:$0x1]
    %v30 = vlaneseq
    %v31 = vshrl.u32 %v30, 7
    %v32 = vsub.s32 0, %v31
    %v33 = vrot.slane %v28, %v32
    %v37 = vunpack.c.l.b16 %v22
    %v38 = vunpack.c.l.b16 %v23
    %v39 = vpack.c.b16 %v38, %v37
    %v44 = vunpack.c.l.b16 %v24
    %v45 = vunpack.c.l.b16 %v25
    %v46 = vunpack.c.l.b16 %v26
    %v47 = vunpack.c.l.b16 %v27
    %v48 = vpack.c.b16 %v45, %v44
    %v49 = vpack.c.b16 %v47, %v46
    %vm52 = vcmask 261120
    %v54 = vsel %vm52, %v39, 0
    %56 = vmatprep.subr.bf16.mxu0 0
    %57 = vmatpush1.bf16.msra.mxu0 %v48
    %58 = vmatprep.subr.bf16.mxu0 0
    %59 = vmatpush1.bf16.msra.mxu0 %v49
    %60 = vmatprep.subr.bf16.mxu0 0
    %61 = vmatpush1.bf16.msra.mxu0 0
    %62 = vmatprep.subr.bf16.mxu0 0
    %63 = vmatpush1.bf16.msra.mxu0 0
    %64 = vmatprep.subr.bf16.mxu0 0
    %65 = vmatpush1.bf16.msra.mxu0 0
    %66 = vmatprep.subr.bf16.mxu0 0
    %67 = vmatpush1.bf16.msra.mxu0 0
    %68 = vmatprep.subr.bf16.mxu0 0
    %69 = vmatpush1.bf16.msra.mxu0 0
    %70 = vmatprep.subr.bf16.mxu0 0
    %71 = vmatpush1.bf16.msra.mxu0 0
    %72 = vmatprep.subr.bf16.mxu0 0
    %73 = vmatpush1.bf16.msra.mxu0 0
    %74 = vmatprep.subr.bf16.mxu0 0
    %75 = vmatpush1.bf16.msra.mxu0 0
    %76 = vmatprep.subr.bf16.mxu0 0
    %77 = vmatpush1.bf16.msra.mxu0 0
    %78 = vmatprep.subr.bf16.mxu0 0
    %79 = vmatpush1.bf16.msra.mxu0 0
    %80 = vmatprep.subr.bf16.mxu0 0
    %81 = vmatpush1.bf16.msra.mxu0 0
    %82 = vmatprep.subr.bf16.mxu0 0
    %83 = vmatpush1.bf16.msra.mxu0 0
    %84 = vmatprep.subr.bf16.mxu0 0
    %85 = vmatpush1.bf16.msra.mxu0 0
    %86 = vmatprep.subr.bf16.mxu0 0
    %87 = vmatpush1.bf16.msra.mxu0 0
    %88 = vmatprep.mubr.bf16.mxu0 0
    %89 = vmatmul.mubr.bf16.gmra.mrb[0].mxu0 %v54
    %v90 = vpop.f32.mrb[0].mxu0
    %v91 = vadd.f32 %v33, %v90
    %v92 = vpop.f32.mrb[0].mxu0
    %v93 = vpop.f32.mrb[0].mxu0
    %v94 = vadd.f32 %v33, %v93
    %v95 = vpop.f32.mrb[0].mxu0
    %96 = vdwg.mxu0
    %v97 = vmul.f32 %v91, %v91
    %v98 = vmul.f32 %v94, %v94
    %v99 = vmul.f32 %v91, %v97
    %v100 = vmul.f32 %v94, %v98
    %v101 = vmul.f32 %v99, 0.044715
    %v102 = vmul.f32 %v100, 0.044715
    %v103 = vadd.f32 %v91, %v101
    %v104 = vadd.f32 %v94, %v102
    %v105 = vmul.f32 %v103, 0.7978846
    %v106 = vmul.f32 %v104, 0.7978846
    %v107 = vtanh.pop %v105
    %v108 = vtanh.pop %v106
    %v109 = vadd.f32 %v107, 1.0
    %v110 = vadd.f32 %v108, 1.0
    %v111 = vmul.f32 %v109, 0.5
    %v112 = vmul.f32 %v110, 0.5
    %v113 = vmul.f32 %v91, %v111
    %v114 = vmul.f32 %v94, %v112
    %v115 = vpack.c.bf16 %v114, %v113
    %v116 = vld [vmem:[%s3] sm:$0xf]
    %v117 = vld [vmem:[%s3 + $0x4] sm:$0xf]
    %v118 = vld [vmem:[%s3 + $0x8] sm:$0xf]
    %v119 = vld [vmem:[%s3 + $0xc] sm:$0xf]
    %v120 = vld [vmem:[%s3 + $0x10] sm:$0xf]
    %v121 = vld [vmem:[%s3 + $0x14] sm:$0xf]
    %v122 = vld [vmem:[%s3 + $0x18] sm:$0xf]
    %v123 = vld [vmem:[%s3 + $0x1c] sm:$0xf]
    %v124 = vld [vmem:[%s4] sm:$0x1]
    %v126 = vlaneseq
    %v127 = vshrl.u32 %v126, 7
    %v128 = vsub.s32 0, %v127
    %v129 = vrot.slane %v124, %v128
    %v139 = vunpack.c.l.b16 %v116
    %v140 = vunpack.c.l.b16 %v117
    %v141 = vunpack.c.l.b16 %v118
    %v142 = vunpack.c.l.b16 %v119
    %v143 = vunpack.c.l.b16 %v120
    %v144 = vunpack.c.l.b16 %v121
    %v145 = vunpack.c.l.b16 %v122
    %v146 = vunpack.c.l.b16 %v123
    %v147 = vpack.c.b16 %v140, %v139
    %v148 = vpack.c.b16 %v142, %v141
    %v149 = vpack.c.b16 %v144, %v143
    %v150 = vpack.c.b16 %v146, %v145
    %vm155 = vcmask 523264
    %v157 = vsel %vm155, %v115, 0
    %159 = vmatprep.subr.bf16.mxu0 0
    %160 = vmatpush1.bf16.msra.mxu0 %v147
    %161 = vmatprep.subr.bf16.mxu0 0
    %162 = vmatpush1.bf16.msra.mxu0 %v148
    %163 = vmatprep.subr.bf16.mxu0 0
    %164 = vmatpush1.bf16.msra.mxu0 %v149
    %165 = vmatprep.subr.bf16.mxu0 0
    %166 = vmatpush1.bf16.msra.mxu0 %v150
    %167 = vmatprep.subr.bf16.mxu0 0
    %168 = vmatpush1.bf16.msra.mxu0 0
    %169 = vmatprep.subr.bf16.mxu0 0
    %170 = vmatpush1.bf16.msra.mxu0 0
    %171 = vmatprep.subr.bf16.mxu0 0
    %172 = vmatpush1.bf16.msra.mxu0 0
    %173 = vmatprep.subr.bf16.mxu0 0
    %174 = vmatpush1.bf16.msra.mxu0 0
    %175 = vmatprep.subr.bf16.mxu0 0
    %176 = vmatpush1.bf16.msra.mxu0 0
    %177 = vmatprep.subr.bf16.mxu0 0
    %178 = vmatpush1.bf16.msra.mxu0 0
    %179 = vmatprep.subr.bf16.mxu0 0
    %180 = vmatpush1.bf16.msra.mxu0 0
    %181 = vmatprep.subr.bf16.mxu0 0
    %182 = vmatpush1.bf16.msra.mxu0 0
    %183 = vmatprep.subr.bf16.mxu0 0
    %184 = vmatpush1.bf16.msra.mxu0 0
    %185 = vmatprep.subr.bf16.mxu0 0
    %186 = vmatpush1.bf16.msra.mxu0 0
    %187 = vmatprep.subr.bf16.mxu0 0
    %188 = vmatpush1.bf16.msra.mxu0 0
    %189 = vmatprep.subr.bf16.mxu0 0
    %190 = vmatpush1.bf16.msra.mxu0 0
    %191 = vmatprep.mubr.bf16.mxu0 0
    %192 = vmatmul.mubr.bf16.gmra.mrb[0].mxu0 %v157
    %v193 = vpop.f32.mrb[0].mxu0
    %v194 = vadd.f32 %v129, %v193
    %v195 = vpop.f32.mrb[0].mxu0
    %v196 = vpop.f32.mrb[0].mxu0
    %v197 = vadd.f32 %v129, %v196
    %v198 = vpop.f32.mrb[0].mxu0
    %199 = vdwg.mxu0
    %200 = vst.msk [vmem:[#allocation2] sm:$0xff] %vm52, %v194
    %201 = vst.msk [vmem:[#allocation2 + $0x8] sm:$0xff] %vm52, %v197
    // Predicated region
    $region22: #{tpu_custom_call.1} parent=1 // pred_check
      _
    $region23: #{tpu_custom_call.1} parent=1 // pred_check_branch
      %203 = sbr.rel (0) target = $region25
    $region24: #{tpu_custom_call.1} parent=1 // pred_region
      %s205 = ssub.s32 256, 256
      %206 = vsyncadd [#allocation3], %s205
      %s207 = sshll.u32 [#allocation2], 4
      %s208 = int_to_ptr.vmem [resolvable:$true] %s207
      %213 = dma.vmem_to_hbm [thread:$0]  %s208, 256, %s5, [#allocation3], 128, 128, 8
    $region25: #{tpu_custom_call.1} parent=1 // pred_fallthru
      _
    // Predicated region
    $region26: #{tpu_custom_call.1} parent=1 // pred_check
      _
    $region27: #{tpu_custom_call.1} parent=1 // pred_check_branch
      %215 = sbr.rel (0) target = $region29
    $region28: #{tpu_custom_call.1} parent=1 // pred_region
      %216 = dma.done [#allocation3], 256
    $region29: #{tpu_custom_call.1} parent=1 // pred_fallthru
      _
    %217 = vsyncpa [#allocation3], 1

</llo_original>
